<compile_context>
chip_gen: v6e
topology: v6e:2x2x1
jax: 0.10.0
libtpu: 0.0.40
codegen_flags: <defaults>
</compile_context>

<pallas_src>
import functools
import math

import jax
import jax.numpy as jnp
from jax import lax
from jax.experimental import pallas as pl
from jax.experimental.pallas import tpu as pltpu

# ---- problem sizes (small, consistent with a per-modality feature batch) ----
B = 8      # batch
D = 32     # feature dim of modality_query
C = 16     # number of classes of the surrogate head
Q = 32     # max_queue_size (rows of the feature queue)
LR = 1e-3  # "optimizer" (plain SGD) learning rate

INV_B = 1.0 / B
INV_Q = 1.0 / Q
LOG_C = math.log(float(C))


def tcr_kernel(steps, sig_ref, x_ref, w_ref, b_ref, q_ref,
               logits_ref, loss_ref, w_new_ref, b_new_ref, q_new_ref):
    """All `steps` forward_and_adapt iterations in one kernel invocation.

    Inputs:
      sig_ref  SMEM (1,) int32  -- update_signal (queue update gate)
      x_ref    (B, D) f32       -- modality_query features
      w_ref    (D, C) f32, b_ref (1, C) f32, q_ref (Q, D) f32
    Outputs:
      logits_ref (B, C)   -- model outputs of the final step (pre-final-update)
      loss_ref   SMEM (4,)-- [loss_REM, loss_UNI, loss_EMG, loss_total] (final step)
      w_new_ref  (D, C), b_new_ref (1, C)  -- adapted head (aliased with inputs)
      q_new_ref  (Q, D)   -- updated queue (aliased with input)
    """
    # ---- loop-invariant data: loaded / computed exactly once ----
    x = x_ref[...]                                        # (B, D)
    q0 = q_ref[...]                                       # (Q, D)
    sig = sig_ref[0]                                      # int32 scalar

    # Augment x with a ones column and W with the bias row so the forward
    # bias-add and the g_b batch reduction both ride the MXU (no VPU broadcast
    # add, no XLU sublane reduce).
    ones_col = jnp.ones((B, 1), dtype=jnp.float32)
    x_aug = jnp.concatenate([x, ones_col], axis=-1)               # (B, D+1)
    w_aug0 = jnp.concatenate([w_ref[...], b_ref[...]], axis=0)    # (D+1, C)

    # hoisted: batch-mean feature direction (only used by the loss-only EMG term)
    x_mean = jnp.sum(x, axis=0, keepdims=True) * INV_B
    xn = x_mean * lax.rsqrt(jnp.sum(x_mean * x_mean, axis=-1, keepdims=True) + 1e-12)

    def forward_grads(w_aug):
        """Forward + analytic d(loss_REM + loss_UNI)/dW_aug.  Only what the
        gradient needs; scalar loss reductions are done once after the loop."""
        z = jnp.dot(x_aug, w_aug, preferred_element_type=jnp.float32)  # (B, C)
        z_max = jnp.max(z, axis=-1, keepdims=True)
        zs = z - z_max
        e = jnp.exp(zs)
        denom = jnp.sum(e, axis=-1, keepdims=True)
        logp = zs - jnp.log(denom)                                     # (B, C)
        p = jnp.exp(logp)                                              # exact, consistent with logp
        H = -jnp.sum(p * logp, axis=-1, keepdims=True)                 # (B, 1)
        pbar = jnp.sum(p, axis=0, keepdims=True) * INV_B               # (1, C)
        log_pbar = jnp.log(pbar + 1e-12)
        # d loss_REM / dz_ij = -(1/B) p_ij (log p_ij + H_i)
        g_rem = -(p * (logp + H)) * INV_B
        # d loss_UNI / dz_ij = (1/B) p_ij (log pbar_j - sum_k p_ik log pbar_k)
        g_uni = p * (log_pbar - jnp.sum(p * log_pbar, axis=-1, keepdims=True)) * INV_B
        g_z = g_rem + g_uni                                            # (B, C)
        # Contract the batch dim on the MXU; row D of the result is the bias grad.
        g_w_aug = lax.dot_general(x_aug, g_z,
                                  dimension_numbers=(((0,), (0,)), ((), ())),
                                  preferred_element_type=jnp.float32)  # (D+1, C)
        return z, H, pbar, log_pbar, g_w_aug

    # ---- steps-1 gradient-only adaptation iterations (no loss reporting) ----
    def body(_, w_aug):
        g_w_aug = forward_grads(w_aug)[-1]
        return w_aug - LR * g_w_aug

    if steps > 1:
        w_aug = lax.fori_loop(0, steps - 1, body, w_aug0, unroll=True)
    else:
        w_aug = w_aug0

    # ---- final adaptation step: forward, report, grad, update ----
    z, H, pbar, log_pbar, g_w_aug = forward_grads(w_aug)
    logits_ref[...] = z            # outputs = final forward, pre-final-update weights

    # Queue FIFO: n gated shifts == drop the n*B oldest rows and append n copies
    # of x (the queue only feeds order-invariant means / the returned buffer).
    upd = (sig > 0).astype(jnp.float32)

    def shifted_queue(n):
        n = min(n, Q // B)
        if n == 0:
            return q0
        parts = ([q0[n * B:, :]] if n * B < Q else []) + [x] * n
        return jnp.concatenate(parts, axis=0)

    q_loss = upd * shifted_queue(steps - 1) + (1.0 - upd) * q0   # queue seen by final step
    q_final = upd * shifted_queue(steps) + (1.0 - upd) * q0      # queue after final step

    # ---- losses (final step only; none of these feed the head gradient) ----
    loss_rem = jnp.sum(H, axis=0, keepdims=True) * INV_B                      # (1, 1)
    loss_uni = jnp.sum(pbar * log_pbar, axis=-1, keepdims=True) + LOG_C       # (1, 1)
    # TODO(synk): exact forward_tta EMG definition is not given in the reference;
    # this is a representative memory-consistency term (no head gradient).
    q_mean = jnp.sum(q_loss, axis=0, keepdims=True) * INV_Q                   # (1, D)
    qn = q_mean * lax.rsqrt(jnp.sum(q_mean * q_mean, axis=-1, keepdims=True) + 1e-12)
    loss_emg = 1.0 - jnp.sum(xn * qn, axis=-1, keepdims=True)                 # (1, 1)
    loss_total = loss_rem + loss_uni + loss_emg

    loss_ref[0] = loss_rem[0, 0]
    loss_ref[1] = loss_uni[0, 0]
    loss_ref[2] = loss_emg[0, 0]
    loss_ref[3] = loss_total[0, 0]

    # ---- optimizer.step(): plain SGD on the augmented head ----
    w_aug_new = w_aug - LR * g_w_aug                       # (D+1, C)
    w_new_ref[...] = w_aug_new[:D, :]
    b_new_ref[...] = w_aug_new[D:D + 1, :]
    q_new_ref[...] = q_final


@functools.partial(jax.jit, static_argnames=("steps",), donate_argnums=(1, 2, 3))
def tcr_forward(x, w, b, queue, update_signal, steps=1):
    """TCR.forward: `steps` fused adapt iterations in a SINGLE pallas_call."""
    out_shapes = (
        jax.ShapeDtypeStruct((B, C), jnp.float32),   # logits (outputs)
        jax.ShapeDtypeStruct((4,), jnp.float32),     # [REM, UNI, EMG, total]
        jax.ShapeDtypeStruct((D, C), jnp.float32),   # updated W
        jax.ShapeDtypeStruct((1, C), jnp.float32),   # updated b
        jax.ShapeDtypeStruct((Q, D), jnp.float32),   # updated queue
    )
    logits, losses, w_new, b_new, q_new = pl.pallas_call(
        functools.partial(tcr_kernel, steps),
        out_shape=out_shapes,
        in_specs=[
            pl.BlockSpec(memory_space=pltpu.MemorySpace.SMEM),   # update_signal
            pl.BlockSpec(memory_space=pltpu.MemorySpace.VMEM),   # x
            pl.BlockSpec(memory_space=pltpu.MemorySpace.VMEM),   # W
            pl.BlockSpec(memory_space=pltpu.MemorySpace.VMEM),   # b
            pl.BlockSpec(memory_space=pltpu.MemorySpace.VMEM),   # queue
        ],
        out_specs=(
            pl.BlockSpec(memory_space=pltpu.MemorySpace.VMEM),   # logits
            pl.BlockSpec(memory_space=pltpu.MemorySpace.SMEM),   # losses
            pl.BlockSpec(memory_space=pltpu.MemorySpace.VMEM),   # adapted W
            pl.BlockSpec(memory_space=pltpu.MemorySpace.VMEM),   # adapted b
            pl.BlockSpec(memory_space=pltpu.MemorySpace.VMEM),   # updated queue
        ),
        # W, b, queue are updated in place (their HBM buffers are reused).
        input_output_aliases={2: 2, 3: 3, 4: 4},
    )(update_signal, x, w, b, queue)
    return q_new, logits, losses, w_new, b_new


if __name__ == "__main__":
    key = jax.random.PRNGKey(0)
    kx, kw, kb, kq = jax.random.split(key, 4)

    # deterministic "modality_query" batch and surrogate-model parameters
    x = jax.random.normal(kx, (B, D), dtype=jnp.float32)
    w = 0.1 * jax.random.normal(kw, (D, C), dtype=jnp.float32)
    b = 0.01 * jax.random.normal(kb, (1, C), dtype=jnp.float32)
    queue_list = jax.random.normal(kq, (Q, D), dtype=jnp.float32)  # feature queue
    update_signal = jnp.array([1], dtype=jnp.int32)

    queue_new, outputs, losses, w_new, b_new = tcr_forward(
        x, w, b, queue_list, update_signal, steps=2)
    jax.block_until_ready((queue_new, outputs, losses, w_new, b_new))

    assert outputs.shape == (B, C)
    assert losses.shape == (4,)
    assert queue_new.shape == (Q, D)
    assert w_new.shape == (D, C) and b_new.shape == (1, C)
    assert bool(jnp.all(jnp.isfinite(losses)))
    # queue FIFO semantics: last B rows must equal the new batch features
    assert bool(jnp.allclose(queue_new[Q - B:], x))

    print("KERNEL_OK")
</pallas_src>

<mosaic_0001>
module attributes {stable_mosaic.version = 11 : i64} {
  func.func @tcr_kernel(%arg0: memref<1xi32, #tpu.memory_space<smem>>, %arg1: memref<8x32xf32, #tpu.memory_space<vmem>>, %arg2: memref<32x16xf32, #tpu.memory_space<vmem>>, %arg3: memref<1x16xf32, #tpu.memory_space<vmem>>, %arg4: memref<32x32xf32, #tpu.memory_space<vmem>>, %arg5: memref<8x16xf32, #tpu.memory_space<vmem>>, %arg6: memref<4xf32, #tpu.memory_space<smem>>, %arg7: memref<32x16xf32, #tpu.memory_space<vmem>>, %arg8: memref<1x16xf32, #tpu.memory_space<vmem>>, %arg9: memref<32x32xf32, #tpu.memory_space<vmem>>) attributes {dimension_semantics = [], scalar_prefetch = 0 : i64, scratch_operands = 0 : i64, tpu.core_type = #tpu.core_type<tc>} {
    %c0 = arith.constant 0 : index
    %c0_0 = arith.constant 0 : index
    %0 = vector.load %arg1[%c0, %c0_0] : memref<8x32xf32, #tpu.memory_space<vmem>>, vector<8x32xf32>
    %c0_1 = arith.constant 0 : index
    %c0_2 = arith.constant 0 : index
    %1 = vector.load %arg4[%c0_1, %c0_2] : memref<32x32xf32, #tpu.memory_space<vmem>>, vector<32x32xf32>
    %c0_3 = arith.constant 0 : index
    %2 = memref.load %arg0[%c0_3] : memref<1xi32, #tpu.memory_space<smem>>
    %cst = arith.constant 1.000000e+00 : f32
    %3 = vector.broadcast %cst : f32 to vector<8x1xf32>
    %4 = tpu.concatenate %0, %3 in 1 : vector<8x32xf32>, vector<8x1xf32> -> vector<8x33xf32>
    %c0_4 = arith.constant 0 : index
    %c0_5 = arith.constant 0 : index
    %5 = vector.load %arg2[%c0_4, %c0_5] : memref<32x16xf32, #tpu.memory_space<vmem>>, vector<32x16xf32>
    %c0_6 = arith.constant 0 : index
    %c0_7 = arith.constant 0 : index
    %6 = vector.load %arg3[%c0_6, %c0_7] : memref<1x16xf32, #tpu.memory_space<vmem>>, vector<1x16xf32>
    %7 = tpu.concatenate %5, %6 in 0 : vector<32x16xf32>, vector<1x16xf32> -> vector<33x16xf32>
    %cst_8 = arith.constant dense<0.000000e+00> : vector<32xf32>
    %8 = vector.multi_reduction <add>, %0, %cst_8 [0] : vector<8x32xf32> to vector<32xf32>
    %9 = vector.shape_cast %8 : vector<32xf32> to vector<1x32xf32>
    %cst_9 = arith.constant 1.250000e-01 : f32
    %10 = vector.broadcast %cst_9 : f32 to vector<1x32xf32>
    %11 = arith.mulf %9, %10 : vector<1x32xf32>
    %12 = arith.mulf %11, %11 : vector<1x32xf32>
    %cst_10 = arith.constant dense<0.000000e+00> : vector<1xf32>
    %13 = vector.multi_reduction <add>, %12, %cst_10 [1] : vector<1x32xf32> to vector<1xf32>
    %14 = vector.shape_cast %13 : vector<1xf32> to vector<1x1xf32>
    %cst_11 = arith.constant 9.99999996E-13 : f32
    %15 = vector.broadcast %cst_11 : f32 to vector<1x1xf32>
    %16 = arith.addf %14, %15 : vector<1x1xf32>
    %17 = math.rsqrt %16 : vector<1x1xf32>
    %18 = vector.broadcast %17 : vector<1x1xf32> to vector<1x32xf32>
    %19 = arith.mulf %11, %18 : vector<1x32xf32>
    %c0_i32 = arith.constant 0 : i32
    %cst_12 = arith.constant dense<0.000000e+00> : vector<8x16xf32>
    %20 = tpu.matmul %4, %7, %cst_12 {dimension_numbers = #tpu.dot_dimension_numbers<[1], [0], [0], [1], [0, 0, 1, 1], [], []>} : vector<8x33xf32>, vector<33x16xf32>, vector<8x16xf32> -> vector<8x16xf32>
    %cst_13 = arith.constant dense<0xFF800000> : vector<8xf32>
    %21 = vector.multi_reduction <maximumf>, %20, %cst_13 [1] : vector<8x16xf32> to vector<8xf32>
    %22 = vector.shape_cast %21 : vector<8xf32> to vector<8x1xf32>
    %23 = vector.broadcast %22 : vector<8x1xf32> to vector<8x16xf32>
    %24 = arith.subf %20, %23 : vector<8x16xf32>
    %25 = math.exp %24 : vector<8x16xf32>
    %cst_14 = arith.constant dense<0.000000e+00> : vector<8xf32>
    %26 = vector.multi_reduction <add>, %25, %cst_14 [1] : vector<8x16xf32> to vector<8xf32>
    %27 = vector.shape_cast %26 : vector<8xf32> to vector<8x1xf32>
    %28 = math.log %27 : vector<8x1xf32>
    %29 = vector.broadcast %28 : vector<8x1xf32> to vector<8x16xf32>
    %30 = arith.subf %24, %29 : vector<8x16xf32>
    %31 = math.exp %30 : vector<8x16xf32>
    %32 = arith.mulf %31, %30 : vector<8x16xf32>
    %cst_15 = arith.constant dense<0.000000e+00> : vector<8xf32>
    %33 = vector.multi_reduction <add>, %32, %cst_15 [1] : vector<8x16xf32> to vector<8xf32>
    %34 = vector.shape_cast %33 : vector<8xf32> to vector<8x1xf32>
    %cst_16 = arith.constant 0.000000e+00 : f32
    %35 = vector.broadcast %cst_16 : f32 to vector<8x1xf32>
    %36 = arith.subf %35, %34 : vector<8x1xf32>
    %cst_17 = arith.constant dense<0.000000e+00> : vector<16xf32>
    %37 = vector.multi_reduction <add>, %31, %cst_17 [0] : vector<8x16xf32> to vector<16xf32>
    %38 = vector.shape_cast %37 : vector<16xf32> to vector<1x16xf32>
    %cst_18 = arith.constant 1.250000e-01 : f32
    %39 = vector.broadcast %cst_18 : f32 to vector<1x16xf32>
    %40 = arith.mulf %38, %39 : vector<1x16xf32>
    %cst_19 = arith.constant 9.99999996E-13 : f32
    %41 = vector.broadcast %cst_19 : f32 to vector<1x16xf32>
    %42 = arith.addf %40, %41 : vector<1x16xf32>
    %43 = math.log %42 : vector<1x16xf32>
    %44 = vector.broadcast %36 : vector<8x1xf32> to vector<8x16xf32>
    %45 = arith.addf %30, %44 : vector<8x16xf32>
    %46 = arith.mulf %31, %45 : vector<8x16xf32>
    %cst_20 = arith.constant 0.000000e+00 : f32
    %47 = vector.broadcast %cst_20 : f32 to vector<8x16xf32>
    %48 = arith.subf %47, %46 : vector<8x16xf32>
    %cst_21 = arith.constant 1.250000e-01 : f32
    %49 = vector.broadcast %cst_21 : f32 to vector<8x16xf32>
    %50 = arith.mulf %48, %49 : vector<8x16xf32>
    %51 = vector.broadcast %43 : vector<1x16xf32> to vector<8x16xf32>
    %52 = arith.mulf %31, %51 : vector<8x16xf32>
    %cst_22 = arith.constant dense<0.000000e+00> : vector<8xf32>
    %53 = vector.multi_reduction <add>, %52, %cst_22 [1] : vector<8x16xf32> to vector<8xf32>
    %54 = vector.shape_cast %53 : vector<8xf32> to vector<8x1xf32>
    %55 = vector.broadcast %43 : vector<1x16xf32> to vector<8x16xf32>
    %56 = vector.broadcast %54 : vector<8x1xf32> to vector<8x16xf32>
    %57 = arith.subf %55, %56 : vector<8x16xf32>
    %58 = arith.mulf %31, %57 : vector<8x16xf32>
    %cst_23 = arith.constant 1.250000e-01 : f32
    %59 = vector.broadcast %cst_23 : f32 to vector<8x16xf32>
    %60 = arith.mulf %58, %59 : vector<8x16xf32>
    %61 = arith.addf %50, %60 : vector<8x16xf32>
    %cst_24 = arith.constant dense<0.000000e+00> : vector<33x16xf32>
    %62 = tpu.matmul %4, %61, %cst_24 {dimension_numbers = #tpu.dot_dimension_numbers<[0], [0], [1], [1], [0, 1, 1, 1], [], []>} : vector<8x33xf32>, vector<8x16xf32>, vector<33x16xf32> -> vector<33x16xf32>
    %cst_25 = arith.constant 1.000000e-03 : f32
    %63 = vector.broadcast %cst_25 : f32 to vector<33x16xf32>
    %64 = arith.mulf %63, %62 : vector<33x16xf32>
    %65 = arith.subf %7, %64 : vector<33x16xf32>
    %cst_26 = arith.constant dense<0.000000e+00> : vector<8x16xf32>
    %66 = tpu.matmul %4, %65, %cst_26 {dimension_numbers = #tpu.dot_dimension_numbers<[1], [0], [0], [1], [0, 0, 1, 1], [], []>} : vector<8x33xf32>, vector<33x16xf32>, vector<8x16xf32> -> vector<8x16xf32>
    %cst_27 = arith.constant dense<0xFF800000> : vector<8xf32>
    %67 = vector.multi_reduction <maximumf>, %66, %cst_27 [1] : vector<8x16xf32> to vector<8xf32>
    %68 = vector.shape_cast %67 : vector<8xf32> to vector<8x1xf32>
    %69 = vector.broadcast %68 : vector<8x1xf32> to vector<8x16xf32>
    %70 = arith.subf %66, %69 : vector<8x16xf32>
    %71 = math.exp %70 : vector<8x16xf32>
    %cst_28 = arith.constant dense<0.000000e+00> : vector<8xf32>
    %72 = vector.multi_reduction <add>, %71, %cst_28 [1] : vector<8x16xf32> to vector<8xf32>
    %73 = vector.shape_cast %72 : vector<8xf32> to vector<8x1xf32>
    %74 = math.log %73 : vector<8x1xf32>
    %75 = vector.broadcast %74 : vector<8x1xf32> to vector<8x16xf32>
    %76 = arith.subf %70, %75 : vector<8x16xf32>
    %77 = math.exp %76 : vector<8x16xf32>
    %78 = arith.mulf %77, %76 : vector<8x16xf32>
    %cst_29 = arith.constant dense<0.000000e+00> : vector<8xf32>
    %79 = vector.multi_reduction <add>, %78, %cst_29 [1] : vector<8x16xf32> to vector<8xf32>
    %80 = vector.shape_cast %79 : vector<8xf32> to vector<8x1xf32>
    %cst_30 = arith.constant 0.000000e+00 : f32
    %81 = vector.broadcast %cst_30 : f32 to vector<8x1xf32>
    %82 = arith.subf %81, %80 : vector<8x1xf32>
    %cst_31 = arith.constant dense<0.000000e+00> : vector<16xf32>
    %83 = vector.multi_reduction <add>, %77, %cst_31 [0] : vector<8x16xf32> to vector<16xf32>
    %84 = vector.shape_cast %83 : vector<16xf32> to vector<1x16xf32>
    %cst_32 = arith.constant 1.250000e-01 : f32
    %85 = vector.broadcast %cst_32 : f32 to vector<1x16xf32>
    %86 = arith.mulf %84, %85 : vector<1x16xf32>
    %cst_33 = arith.constant 9.99999996E-13 : f32
    %87 = vector.broadcast %cst_33 : f32 to vector<1x16xf32>
    %88 = arith.addf %86, %87 : vector<1x16xf32>
    %89 = math.log %88 : vector<1x16xf32>
    %90 = vector.broadcast %82 : vector<8x1xf32> to vector<8x16xf32>
    %91 = arith.addf %76, %90 : vector<8x16xf32>
    %92 = arith.mulf %77, %91 : vector<8x16xf32>
    %cst_34 = arith.constant 0.000000e+00 : f32
    %93 = vector.broadcast %cst_34 : f32 to vector<8x16xf32>
    %94 = arith.subf %93, %92 : vector<8x16xf32>
    %cst_35 = arith.constant 1.250000e-01 : f32
    %95 = vector.broadcast %cst_35 : f32 to vector<8x16xf32>
    %96 = arith.mulf %94, %95 : vector<8x16xf32>
    %97 = vector.broadcast %89 : vector<1x16xf32> to vector<8x16xf32>
    %98 = arith.mulf %77, %97 : vector<8x16xf32>
    %cst_36 = arith.constant dense<0.000000e+00> : vector<8xf32>
    %99 = vector.multi_reduction <add>, %98, %cst_36 [1] : vector<8x16xf32> to vector<8xf32>
    %100 = vector.shape_cast %99 : vector<8xf32> to vector<8x1xf32>
    %101 = vector.broadcast %89 : vector<1x16xf32> to vector<8x16xf32>
    %102 = vector.broadcast %100 : vector<8x1xf32> to vector<8x16xf32>
    %103 = arith.subf %101, %102 : vector<8x16xf32>
    %104 = arith.mulf %77, %103 : vector<8x16xf32>
    %cst_37 = arith.constant 1.250000e-01 : f32
    %105 = vector.broadcast %cst_37 : f32 to vector<8x16xf32>
    %106 = arith.mulf %104, %105 : vector<8x16xf32>
    %107 = arith.addf %96, %106 : vector<8x16xf32>
    %cst_38 = arith.constant dense<0.000000e+00> : vector<33x16xf32>
    %108 = tpu.matmul %4, %107, %cst_38 {dimension_numbers = #tpu.dot_dimension_numbers<[0], [0], [1], [1], [0, 1, 1, 1], [], []>} : vector<8x33xf32>, vector<8x16xf32>, vector<33x16xf32> -> vector<33x16xf32>
    %c0_39 = arith.constant 0 : index
    %c0_40 = arith.constant 0 : index
    %109 = vector.load %arg5[%c0_39, %c0_40] : memref<8x16xf32, #tpu.memory_space<vmem>>, vector<8x16xf32>
    tpu.vector_store %arg5[%c0_39, %c0_40], %66 {strides = array<i32>} : memref<8x16xf32, #tpu.memory_space<vmem>>, vector<8x16xf32>,
    %c0_i32_41 = arith.constant 0 : i32
    %110 = arith.cmpi sgt, %2, %c0_i32_41 : i32
    %111 = arith.extui %110 : i1 to i32
    %112 = arith.sitofp %111 : i32 to f32
    %113 = vector.extract_strided_slice %1 {offsets = [8, 0], sizes = [24, 32], strides = [1, 1]} : vector<32x32xf32> to vector<24x32xf32>
    %114 = tpu.concatenate %113, %0 in 0 : vector<24x32xf32>, vector<8x32xf32> -> vector<32x32xf32>
    %115 = vector.broadcast %112 : f32 to vector<32x32xf32>
    %116 = arith.mulf %115, %114 : vector<32x32xf32>
    %cst_42 = arith.constant 1.000000e+00 : f32
    %117 = arith.subf %cst_42, %112 : f32
    %118 = vector.broadcast %117 : f32 to vector<32x32xf32>
    %119 = arith.mulf %118, %1 : vector<32x32xf32>
    %120 = arith.addf %116, %119 : vector<32x32xf32>
    %121 = vector.extract_strided_slice %1 {offsets = [16, 0], sizes = [16, 32], strides = [1, 1]} : vector<32x32xf32> to vector<16x32xf32>
    %122 = tpu.concatenate %121, %0, %0 in 0 : vector<16x32xf32>, vector<8x32xf32>, vector<8x32xf32> -> vector<32x32xf32>
    %123 = vector.broadcast %112 : f32 to vector<32x32xf32>
    %124 = arith.mulf %123, %122 : vector<32x32xf32>
    %cst_43 = arith.constant 1.000000e+00 : f32
    %125 = arith.subf %cst_43, %112 : f32
    %126 = vector.broadcast %125 : f32 to vector<32x32xf32>
    %127 = arith.mulf %126, %1 : vector<32x32xf32>
    %128 = arith.addf %124, %127 : vector<32x32xf32>
    %cst_44 = arith.constant dense<0.000000e+00> : vector<1xf32>
    %129 = vector.multi_reduction <add>, %82, %cst_44 [0] : vector<8x1xf32> to vector<1xf32>
    %130 = vector.shape_cast %129 : vector<1xf32> to vector<1x1xf32>
    %cst_45 = arith.constant 1.250000e-01 : f32
    %131 = vector.broadcast %cst_45 : f32 to vector<1x1xf32>
    %132 = arith.mulf %130, %131 : vector<1x1xf32>
    %133 = arith.mulf %86, %89 : vector<1x16xf32>
    %cst_46 = arith.constant dense<0.000000e+00> : vector<1xf32>
    %134 = vector.multi_reduction <add>, %133, %cst_46 [1] : vector<1x16xf32> to vector<1xf32>
    %135 = vector.shape_cast %134 : vector<1xf32> to vector<1x1xf32>
    %cst_47 = arith.constant 2.77258873 : f32
    %136 = vector.broadcast %cst_47 : f32 to vector<1x1xf32>
    %137 = arith.addf %135, %136 : vector<1x1xf32>
    %cst_48 = arith.constant dense<0.000000e+00> : vector<32xf32>
    %138 = vector.multi_reduction <add>, %120, %cst_48 [0] : vector<32x32xf32> to vector<32xf32>
    %139 = vector.shape_cast %138 : vector<32xf32> to vector<1x32xf32>
    %cst_49 = arith.constant 3.125000e-02 : f32
    %140 = vector.broadcast %cst_49 : f32 to vector<1x32xf32>
    %141 = arith.mulf %139, %140 : vector<1x32xf32>
    %142 = arith.mulf %141, %141 : vector<1x32xf32>
    %cst_50 = arith.constant dense<0.000000e+00> : vector<1xf32>
    %143 = vector.multi_reduction <add>, %142, %cst_50 [1] : vector<1x32xf32> to vector<1xf32>
    %144 = vector.shape_cast %143 : vector<1xf32> to vector<1x1xf32>
    %cst_51 = arith.constant 9.99999996E-13 : f32
    %145 = vector.broadcast %cst_51 : f32 to vector<1x1xf32>
    %146 = arith.addf %144, %145 : vector<1x1xf32>
    %147 = math.rsqrt %146 : vector<1x1xf32>
    %148 = vector.broadcast %147 : vector<1x1xf32> to vector<1x32xf32>
    %149 = arith.mulf %141, %148 : vector<1x32xf32>
    %150 = arith.mulf %19, %149 : vector<1x32xf32>
    %cst_52 = arith.constant dense<0.000000e+00> : vector<1xf32>
    %151 = vector.multi_reduction <add>, %150, %cst_52 [1] : vector<1x32xf32> to vector<1xf32>
    %152 = vector.shape_cast %151 : vector<1xf32> to vector<1x1xf32>
    %cst_53 = arith.constant 1.000000e+00 : f32
    %153 = vector.broadcast %cst_53 : f32 to vector<1x1xf32>
    %154 = arith.subf %153, %152 : vector<1x1xf32>
    %155 = arith.addf %132, %137 : vector<1x1xf32>
    %156 = arith.addf %155, %154 : vector<1x1xf32>
    %157 = vector.extract %132[0, 0] : f32 from vector<1x1xf32>
    %c0_54 = arith.constant 0 : index
    %158 = memref.load %arg6[%c0_54] : memref<4xf32, #tpu.memory_space<smem>>
    memref.store %157, %arg6[%c0_54] : memref<4xf32, #tpu.memory_space<smem>>
    %159 = vector.extract %137[0, 0] : f32 from vector<1x1xf32>
    %c1 = arith.constant 1 : index
    %160 = memref.load %arg6[%c1] : memref<4xf32, #tpu.memory_space<smem>>
    memref.store %159, %arg6[%c1] : memref<4xf32, #tpu.memory_space<smem>>
    %161 = vector.extract %154[0, 0] : f32 from vector<1x1xf32>
    %c2 = arith.constant 2 : index
    %162 = memref.load %arg6[%c2] : memref<4xf32, #tpu.memory_space<smem>>
    memref.store %161, %arg6[%c2] : memref<4xf32, #tpu.memory_space<smem>>
    %163 = vector.extract %156[0, 0] : f32 from vector<1x1xf32>
    %c3 = arith.constant 3 : index
    %164 = memref.load %arg6[%c3] : memref<4xf32, #tpu.memory_space<smem>>
    memref.store %163, %arg6[%c3] : memref<4xf32, #tpu.memory_space<smem>>
    %cst_55 = arith.constant 1.000000e-03 : f32
    %165 = vector.broadcast %cst_55 : f32 to vector<33x16xf32>
    %166 = arith.mulf %165, %108 : vector<33x16xf32>
    %167 = arith.subf %65, %166 : vector<33x16xf32>
    %168 = vector.extract_strided_slice %167 {offsets = [0, 0], sizes = [32, 16], strides = [1, 1]} : vector<33x16xf32> to vector<32x16xf32>
    %c0_56 = arith.constant 0 : index
    %c0_57 = arith.constant 0 : index
    %169 = vector.load %arg7[%c0_56, %c0_57] : memref<32x16xf32, #tpu.memory_space<vmem>>, vector<32x16xf32>
    tpu.vector_store %arg7[%c0_56, %c0_57], %168 {strides = array<i32>} : memref<32x16xf32, #tpu.memory_space<vmem>>, vector<32x16xf32>,
    %170 = vector.extract_strided_slice %167 {offsets = [32, 0], sizes = [1, 16], strides = [1, 1]} : vector<33x16xf32> to vector<1x16xf32>
    %c0_58 = arith.constant 0 : index
    %c0_59 = arith.constant 0 : index
    %171 = vector.load %arg8[%c0_58, %c0_59] : memref<1x16xf32, #tpu.memory_space<vmem>>, vector<1x16xf32>
    tpu.vector_store %arg8[%c0_58, %c0_59], %170 {strides = array<i32>} : memref<1x16xf32, #tpu.memory_space<vmem>>, vector<1x16xf32>,
    %c0_60 = arith.constant 0 : index
    %c0_61 = arith.constant 0 : index
    %172 = vector.load %arg9[%c0_60, %c0_61] : memref<32x32xf32, #tpu.memory_space<vmem>>, vector<32x32xf32>
    tpu.vector_store %arg9[%c0_60, %c0_61], %128 {strides = array<i32>} : memref<32x32xf32, #tpu.memory_space<vmem>>, vector<32x32xf32>,
    return
  }
}

</mosaic_0001>

<llo_original>
// kernel: tcr_forward.1
$region0: #{tcr_forward.1}
  #allocation0 [shape = 'u32[]', space=smem, size = 0x4, offset = 0x4, fixed_abs, tag = 'smem constant byte address 0x4 - core index']
  #allocation1 [shape = 'u32[144,128]{1,0:T(1,128)}', space=vmem, size = 0x12000, scoped, tag = 'internal scratch']
  #allocation2 [shape = 's32[1]{0:T(128)S(6)}', space=smem, size = 0x200, scoped, tag = 'scoped memory for tcr_forward.1']
  %s0 = inlined_call_operand.<no memory space> [shape: s32[1], index: 0, kind: input, shape index: {}]
  %s1 = inlined_call_operand.vmem [shape: f32[8,32], index: 1, kind: input, shape index: {}]
  %s2 = inlined_call_operand.vmem [shape: f32[32,16], index: 2, kind: input, shape index: {}, may-alias: {2,7}]
  %s3 = inlined_call_operand.vmem [shape: f32[1,16], index: 3, kind: input, shape index: {}, may-alias: {3,8}]
  %s4 = inlined_call_operand.vmem [shape: f32[32,32], index: 4, kind: input, shape index: {}, may-alias: {4,9}]
  %s5 = inlined_call_operand.hbm [shape: f32[8,16], index: 5, kind: output, shape index: {0}]
  %s6 = inlined_call_operand.hbm [shape: f32[4], index: 6, kind: output, shape index: {1}]
  %s7 = inlined_call_operand.vmem [shape: f32[32,16], index: 7, kind: output, shape index: {2}, may-alias: {2,7}]
  %s8 = inlined_call_operand.vmem [shape: f32[1,16], index: 8, kind: output, shape index: {3}, may-alias: {3,8}]
  %s9 = inlined_call_operand.vmem [shape: f32[32,32], index: 9, kind: output, shape index: {4}, may-alias: {4,9}]
  %10 = xla_tuple %s5, %s6, %s7, %s8, %s9
  %s11 = sld [smem:[#allocation0]]
  $region62: #{tcr_forward.1} parent=0
    _
  %s13 = ssub.s32 1, %s11
  %s14 = scalar_select 0, %s13, %s11
  %15 = sst [smem:[#allocation2]] %s0
  $region1: #{tcr_forward.1} parent=0
    #allocation3 [shape = 'u8[4096]{0}', space=vmem, size = 0x1000, scoped, tag = 'output window, operand 0, single buffered']
    #allocation4 [shape = 's32[1]{0}', space=sflag, size = 0x4, scoped, tag = 'scoped memory for tcr_forward.1']
    #allocation5 [shape = 's32[1]{0}', space=sflag, size = 0x4, scoped, tag = 'scoped memory for tcr_forward.1']
    #allocation6 [shape = 'u8[512]{0}', space=smem, size = 0x200, scoped, tag = 'output window, operand 1, single buffered']
    %16 = vsyncpa [#allocation4], 0
    %17 = vsyncpa [#allocation5], 0
    // Predicated region
    $region2: #{tcr_forward.1} parent=1 // pred_check
      _
    $region3: #{tcr_forward.1} parent=1 // pred_check_branch
      %19 = sbr.rel (0) target = $region5
    $region4: #{tcr_forward.1} parent=1 // pred_region
      _
    $region5: #{tcr_forward.1} parent=1 // pred_fallthru
      _
    // Predicated region
    $region6: #{tcr_forward.1} parent=1 // pred_check
      _
    $region7: #{tcr_forward.1} parent=1 // pred_check_branch
      %21 = sbr.rel (0) target = $region9
    $region8: #{tcr_forward.1} parent=1 // pred_region
      _
    $region9: #{tcr_forward.1} parent=1 // pred_fallthru
      _
    // Predicated region
    $region10: #{tcr_forward.1} parent=1 // pred_check
      _
    $region11: #{tcr_forward.1} parent=1 // pred_check_branch
      %23 = sbr.rel (0) target = $region13
    $region12: #{tcr_forward.1} parent=1 // pred_region
      _
    $region13: #{tcr_forward.1} parent=1 // pred_fallthru
      _
    // Predicated region
    $region14: #{tcr_forward.1} parent=1 // pred_check
      _
    $region15: #{tcr_forward.1} parent=1 // pred_check_branch
      %25 = sbr.rel (0) target = $region17
    $region16: #{tcr_forward.1} parent=1 // pred_region
      _
    $region17: #{tcr_forward.1} parent=1 // pred_fallthru
      _
    // Predicated region
    $region18: #{tcr_forward.1} parent=1 // pred_check
      _
    $region19: #{tcr_forward.1} parent=1 // pred_check_branch
      %27 = sbr.rel (0) target = $region21
    $region20: #{tcr_forward.1} parent=1 // pred_region
      _
    $region21: #{tcr_forward.1} parent=1 // pred_fallthru
      _
    %v28 = vld [vmem:[%s1] sm:$0xff]
    %v29 = vld [vmem:[%s4] sm:$0xff]
    %v30 = vld [vmem:[%s4 + $0x8] sm:$0xff]
    %v31 = vld [vmem:[%s4 + $0x10] sm:$0xff]
    %v32 = vld [vmem:[%s4 + $0x18] sm:$0xff]
    %s33 = sld [smem:[#allocation2]]
    %vm34 = vcmask 261120
    %v35 = vsel %vm34, %v28, 1.0
    %v36 = vld [vmem:[%s2] sm:$0xff]
    %v37 = vld [vmem:[%s2 + $0x8] sm:$0xff]
    %v38 = vld [vmem:[%s2 + $0x10] sm:$0xff]
    %v39 = vld [vmem:[%s2 + $0x18] sm:$0xff]
    %v40 = vld [vmem:[%s3] sm:$0x1]
    %v41 = vsel %vm34, %v28, 0.0
    %v42 = vrot.slane %v41, 4
    %v43 = vadd.f32 %v41, %v42
    %v44 = vrot.slane %v43, 2
    %v45 = vadd.f32 %v43, %v44
    %v46 = vrot.slane %v45, 1
    %v47 = vadd.f32 %v45, %v46
    %v48 = vmul.f32 %v47, 0.125
    %v49 = vmul.f32 %v48, %v48
    %v50 = vsel %vm34, %v49, 0.0
    %51 = vadd.xlane.f32.xlu0 %v50
    %v52 = vpop.xlane.xlu0 %51
    %v53 = vadd.f32 %v52, 1e-12
    %v54 = vrsqrt.pop %v53
    %v55 = vmul.f32 %v48, %v54
    %vm56 = vcmask 269312
    %v58 = vsel %vm56, %v35, 0
    %vm60 = vcmask 1040384
    %v62 = vsel %vm60, %v40, 0
    %64 = vmatprep.subr.mxu0 0.0
    %65 = vmatpush1.msra.mxu0 0.0
    %66 = vmatprep.subr.mxu0 0.0
    %67 = vmatpush1.msra.mxu0 0.0
    %68 = vmatprep.subr.mxu0 0.0
    %69 = vmatpush1.msra.mxu0 0.0
    %70 = vmatprep.subr.mxu0 0.0
    %71 = vmatpush1.msra.mxu0 0.0
    %72 = vmatprep.subr.mxu0 0.0
    %73 = vmatpush1.msra.mxu0 0.0
    %74 = vmatprep.subr.mxu0 0.0
    %75 = vmatpush1.msra.mxu0 0.0
    %76 = vmatprep.subr.mxu0 0.0
    %77 = vmatpush1.msra.mxu0 0.0
    %78 = vmatprep.subr.mxu0 0.0
    %79 = vmatpush1.msra.mxu0 0.0
    %80 = vmatprep.subr.mxu0 0.0
    %81 = vmatpush1.msra.mxu0 0.0
    %82 = vmatprep.subr.mxu0 0.0
    %83 = vmatpush1.msra.mxu0 0.0
    %84 = vmatprep.subr.mxu0 0.0
    %85 = vmatpush1.msra.mxu0 0.0
    %86 = vmatprep.subr.mxu0 0.0
    %87 = vmatpush1.msra.mxu0 %v62
    %88 = vmatprep.subr.mxu0 0.0
    %89 = vmatpush1.msra.mxu0 %v39
    %90 = vmatprep.subr.mxu0 0.0
    %91 = vmatpush1.msra.mxu0 %v38
    %92 = vmatprep.subr.mxu0 0.0
    %93 = vmatpush1.msra.mxu0 %v37
    %94 = vmatprep.subr.mxu0 0.0
    %95 = vmatpush1.msra.mxu0 %v36
    %96 = vmatprep.subr.mxu0 0.0
    %97 = vmatpush2.msra.mxu0 0.0
    %98 = vmatprep.subr.mxu0 0.0
    %99 = vmatpush2.msra.mxu0 0.0
    %100 = vmatprep.subr.mxu0 0.0
    %101 = vmatpush2.msra.mxu0 0.0
    %102 = vmatprep.subr.mxu0 0.0
    %103 = vmatpush2.msra.mxu0 0.0
    %104 = vmatprep.subr.mxu0 0.0
    %105 = vmatpush2.msra.mxu0 0.0
    %106 = vmatprep.subr.mxu0 0.0
    %107 = vmatpush2.msra.mxu0 0.0
    %108 = vmatprep.subr.mxu0 0.0
    %109 = vmatpush2.msra.mxu0 0.0
    %110 = vmatprep.subr.mxu0 0.0
    %111 = vmatpush2.msra.mxu0 0.0
    %112 = vmatprep.subr.mxu0 0.0
    %113 = vmatpush2.msra.mxu0 0.0
    %114 = vmatprep.subr.mxu0 0.0
    %115 = vmatpush2.msra.mxu0 0.0
    %116 = vmatprep.subr.mxu0 0.0
    %117 = vmatpush2.msra.mxu0 0.0
    %118 = vmatprep.subr.mxu0 0.0
    %119 = vmatpush2.msra.mxu0 0.0
    %120 = vmatprep.subr.mxu0 0.0
    %121 = vmatpush2.msra.mxu0 0.0
    %122 = vmatprep.subr.mxu0 0.0
    %123 = vmatpush2.msra.mxu0 0.0
    %124 = vmatprep.subr.mxu0 0.0
    %125 = vmatpush2.msra.mxu0 0.0
    %126 = vmatprep.subr.mxu0 0.0
    %127 = vmatpush2.msra.mxu0 0.0
    %128 = vmatprep.mubr.f32.mxu0 0.0
    %129 = vmatmul.mubr.f32.gmra.mxu0 %v58
    %v130 = vpop.f32.mrf.mxu0
    %v131 = vadd.f32 0.0, %v130
    %v132 = vpop.f32.mrf.mxu0
    %133 = vdwg.mxu0
    %vm134 = vcmask 130048
    %v135 = vsel %vm134, %v131, -inf
    %136 = vmax.xlane.f32.xlu0 %v135
    %v137 = vpop.xlane.xlu0 %136
    %v138 = vsub.f32 %v131, %v137
    %v139 = vmul.f32 %v138, 1.442695
    %v140 = vpow.pop %v139
    %v141 = vsel %vm134, %v140, 0.0
    %142 = vadd.xlane.f32.xlu0 %v141
    %v143 = vpop.xlane.xlu0 %142
    %v144 = vlog2.pop %v143
    %v145 = vmul.f32 %v144, 0.6931472
    %v146 = vsub.f32 %v138, %v145
    %v147 = vmul.f32 %v146, 1.442695
    %v148 = vpow.pop %v147
    %v149 = vmul.f32 %v148, %v146
    %v150 = vsel %vm134, %v149, 0.0
    %151 = vadd.xlane.f32.xlu0 %v150
    %v152 = vpop.xlane.xlu0 %151
    %v153 = vsub.f32 0.0, %v152
    %v154 = vsel %vm134, %v148, 0.0
    %v155 = vrot.slane %v154, 4
    %v156 = vadd.f32 %v154, %v155
    %v157 = vrot.slane %v156, 2
    %v158 = vadd.f32 %v156, %v157
    %v159 = vrot.slane %v158, 1
    %v160 = vadd.f32 %v158, %v159
    %v161 = vmul.f32 %v160, 0.125
    %v162 = vadd.f32 %v161, 1e-12
    %v163 = vlog2.pop %v162
    %v164 = vmul.f32 %v163, 0.6931472
    %v165 = vadd.f32 %v146, %v153
    %v166 = vmul.f32 %v148, %v165
    %v167 = vsub.f32 0.0, %v166
    %v168 = vmul.f32 %v167, 0.125
    %v169 = vmul.f32 %v148, %v164
    %v170 = vsel %vm134, %v169, 0.0
    %171 = vadd.xlane.f32.xlu0 %v170
    %v172 = vpop.xlane.xlu0 %171
    %v173 = vsub.f32 %v164, %v172
    %v174 = vmul.f32 %v148, %v173
    %v175 = vmul.f32 %v174, 0.125
    %v176 = vadd.f32 %v168, %v175
    %177 = vxpose.xlu0.b32.start [1/16] %v35, 128
    %178 = vxpose.xlu0.b32.cont [2/16] 0.0, 128
    %179 = vxpose.xlu0.b32.cont [3/16] 0.0, 128
    %180 = vxpose.xlu0.b32.cont [4/16] 0.0, 128
    %181 = vxpose.xlu0.b32.cont [5/16] 0.0, 128
    %182 = vxpose.xlu0.b32.cont [6/16] 0.0, 128
    %183 = vxpose.xlu0.b32.cont [7/16] 0.0, 128
    %184 = vxpose.xlu0.b32.cont [8/16] 0.0, 128
    %185 = vxpose.xlu0.b32.cont [9/16] 0.0, 128
    %186 = vxpose.xlu0.b32.cont [10/16] 0.0, 128
    %187 = vxpose.xlu0.b32.cont [11/16] 0.0, 128
    %188 = vxpose.xlu0.b32.cont [12/16] 0.0, 128
    %189 = vxpose.xlu0.b32.cont [13/16] 0.0, 128
    %190 = vxpose.xlu0.b32.cont [14/16] 0.0, 128
    %191 = vxpose.xlu0.b32.cont [15/16] 0.0, 128
    %192 = vxpose.xlu0.b32.end [16/16] 0.0, 128
    %v193 = vpop.trf.xlu0
    %v194 = vpop.trf.xlu0
    %v195 = vpop.trf.xlu0
    %v196 = vpop.trf.xlu0
    %v197 = vpop.trf.xlu0
    %v198 = vpop.trf.xlu0
    %v199 = vpop.trf.xlu0
    %v200 = vpop.trf.xlu0
    %v201 = vpop.trf.xlu0
    %v202 = vpop.trf.xlu0
    %v203 = vpop.trf.xlu0
    %v204 = vpop.trf.xlu0
    %v205 = vpop.trf.xlu0
    %v206 = vpop.trf.xlu0
    %v207 = vpop.trf.xlu0
    %v208 = vpop.trf.xlu0
    %vm209 = vcmask 64512
    %v211 = vsel %vm209, %v193, 0
    %v214 = vsel %vm209, %v194, 0
    %v217 = vsel %vm209, %v195, 0
    %v220 = vsel %vm209, %v196, 0
    %v223 = vsel %vm209, %v197, 0
    %225 = vmatprep.subr.mxu0 0.0
    %226 = vmatpush1.msra.mxu0 0.0
    %227 = vmatprep.subr.mxu0 0.0
    %228 = vmatpush1.msra.mxu0 0.0
    %229 = vmatprep.subr.mxu0 0.0
    %230 = vmatpush1.msra.mxu0 0.0
    %231 = vmatprep.subr.mxu0 0.0
    %232 = vmatpush1.msra.mxu0 0.0
    %233 = vmatprep.subr.mxu0 0.0
    %234 = vmatpush1.msra.mxu0 0.0
    %235 = vmatprep.subr.mxu0 0.0
    %236 = vmatpush1.msra.mxu0 0.0
    %237 = vmatprep.subr.mxu0 0.0
    %238 = vmatpush1.msra.mxu0 0.0
    %239 = vmatprep.subr.mxu0 0.0
    %240 = vmatpush1.msra.mxu0 0.0
    %241 = vmatprep.subr.mxu0 0.0
    %242 = vmatpush1.msra.mxu0 0.0
    %243 = vmatprep.subr.mxu0 0.0
    %244 = vmatpush1.msra.mxu0 0.0
    %245 = vmatprep.subr.mxu0 0.0
    %246 = vmatpush1.msra.mxu0 0.0
    %247 = vmatprep.subr.mxu0 0.0
    %248 = vmatpush1.msra.mxu0 0.0
    %249 = vmatprep.subr.mxu0 0.0
    %250 = vmatpush1.msra.mxu0 0.0
    %251 = vmatprep.subr.mxu0 0.0
    %252 = vmatpush1.msra.mxu0 0.0
    %253 = vmatprep.subr.mxu0 0.0
    %254 = vmatpush1.msra.mxu0 0.0
    %255 = vmatprep.subr.mxu0 0.0
    %256 = vmatpush1.msra.mxu0 %v176
    %257 = vmatprep.subr.mxu0 0.0
    %258 = vmatpush2.msra.mxu0 0.0
    %259 = vmatprep.subr.mxu0 0.0
    %260 = vmatpush2.msra.mxu0 0.0
    %261 = vmatprep.subr.mxu0 0.0
    %262 = vmatpush2.msra.mxu0 0.0
    %263 = vmatprep.subr.mxu0 0.0
    %264 = vmatpush2.msra.mxu0 0.0
    %265 = vmatprep.subr.mxu0 0.0
    %266 = vmatpush2.msra.mxu0 0.0
    %267 = vmatprep.subr.mxu0 0.0
    %268 = vmatpush2.msra.mxu0 0.0
    %269 = vmatprep.subr.mxu0 0.0
    %270 = vmatpush2.msra.mxu0 0.0
    %271 = vmatprep.subr.mxu0 0.0
    %272 = vmatpush2.msra.mxu0 0.0
    %273 = vmatprep.subr.mxu0 0.0
    %274 = vmatpush2.msra.mxu0 0.0
    %275 = vmatprep.subr.mxu0 0.0
    %276 = vmatpush2.msra.mxu0 0.0
    %277 = vmatprep.subr.mxu0 0.0
    %278 = vmatpush2.msra.mxu0 0.0
    %279 = vmatprep.subr.mxu0 0.0
    %280 = vmatpush2.msra.mxu0 0.0
    %281 = vmatprep.subr.mxu0 0.0
    %282 = vmatpush2.msra.mxu0 0.0
    %283 = vmatprep.subr.mxu0 0.0
    %284 = vmatpush2.msra.mxu0 0.0
    %285 = vmatprep.subr.mxu0 0.0
    %286 = vmatpush2.msra.mxu0 0.0
    %287 = vmatprep.subr.mxu0 0.0
    %288 = vmatpush2.msra.mxu0 0.0
    %289 = vmatprep.mubr.f32.mxu0 0.0
    %290 = vmatmul.mubr.f32.gmra.mxu0 %v211
    %v291 = vpop.f32.mrf.mxu0
    %v292 = vadd.f32 0.0, %v291
    %v293 = vpop.f32.mrf.mxu0
    %294 = vmatprep.mubr.f32.mxu0 0.0
    %295 = vmatmul.mubr.f32.gmra.mxu0 %v214
    %v296 = vpop.f32.mrf.mxu0
    %v297 = vadd.f32 0.0, %v296
    %v298 = vpop.f32.mrf.mxu0
    %299 = vmatprep.mubr.f32.mxu0 0.0
    %300 = vmatmul.mubr.f32.gmra.mxu0 %v217
    %v301 = vpop.f32.mrf.mxu0
    %v302 = vadd.f32 0.0, %v301
    %v303 = vpop.f32.mrf.mxu0
    %304 = vmatprep.mubr.f32.mxu0 0.0
    %305 = vmatmul.mubr.f32.gmra.mxu0 %v220
    %v306 = vpop.f32.mrf.mxu0
    %v307 = vadd.f32 0.0, %v306
    %v308 = vpop.f32.mrf.mxu0
    %309 = vmatprep.mubr.f32.mxu0 0.0
    %310 = vmatmul.mubr.f32.gmra.mxu0 %v223
    %v311 = vpop.f32.mrf.mxu0
    %v312 = vadd.f32 0.0, %v311
    %v313 = vpop.f32.mrf.mxu0
    %314 = vdwg.mxu0
    %v315 = vmul.f32 %v292, 0.001
    %v316 = vmul.f32 %v297, 0.001
    %v317 = vmul.f32 %v302, 0.001
    %v318 = vmul.f32 %v307, 0.001
    %v319 = vmul.f32 %v312, 0.001
    %v320 = vsub.f32 %v36, %v315
    %v321 = vsub.f32 %v37, %v316
    %v322 = vsub.f32 %v38, %v317
    %v323 = vsub.f32 %v39, %v318
    %v324 = vsub.f32 %v40, %v319
    %v326 = vsel %vm60, %v324, 0
    %328 = vmatprep.subr.mxu0 0.0
    %329 = vmatpush1.msra.mxu0 0.0
    %330 = vmatprep.subr.mxu0 0.0
    %331 = vmatpush1.msra.mxu0 0.0
    %332 = vmatprep.subr.mxu0 0.0
    %333 = vmatpush1.msra.mxu0 0.0
    %334 = vmatprep.subr.mxu0 0.0
    %335 = vmatpush1.msra.mxu0 0.0
    %336 = vmatprep.subr.mxu0 0.0
    %337 = vmatpush1.msra.mxu0 0.0
    %338 = vmatprep.subr.mxu0 0.0
    %339 = vmatpush1.msra.mxu0 0.0
    %340 = vmatprep.subr.mxu0 0.0
    %341 = vmatpush1.msra.mxu0 0.0
    %342 = vmatprep.subr.mxu0 0.0
    %343 = vmatpush1.msra.mxu0 0.0
    %344 = vmatprep.subr.mxu0 0.0
    %345 = vmatpush1.msra.mxu0 0.0
    %346 = vmatprep.subr.mxu0 0.0
    %347 = vmatpush1.msra.mxu0 0.0
    %348 = vmatprep.subr.mxu0 0.0
    %349 = vmatpush1.msra.mxu0 0.0
    %350 = vmatprep.subr.mxu0 0.0
    %351 = vmatpush1.msra.mxu0 %v326
    %352 = vmatprep.subr.mxu0 0.0
    %353 = vmatpush1.msra.mxu0 %v323
    %354 = vmatprep.subr.mxu0 0.0
    %355 = vmatpush1.msra.mxu0 %v322
    %356 = vmatprep.subr.mxu0 0.0
    %357 = vmatpush1.msra.mxu0 %v321
    %358 = vmatprep.subr.mxu0 0.0
    %359 = vmatpush1.msra.mxu0 %v320
    %360 = vmatprep.subr.mxu0 0.0
    %361 = vmatpush2.msra.mxu0 0.0
    %362 = vmatprep.subr.mxu0 0.0
    %363 = vmatpush2.msra.mxu0 0.0
    %364 = vmatprep.subr.mxu0 0.0
    %365 = vmatpush2.msra.mxu0 0.0
    %366 = vmatprep.subr.mxu0 0.0
    %367 = vmatpush2.msra.mxu0 0.0
    %368 = vmatprep.subr.mxu0 0.0
    %369 = vmatpush2.msra.mxu0 0.0
    %370 = vmatprep.subr.mxu0 0.0
    %371 = vmatpush2.msra.mxu0 0.0
    %372 = vmatprep.subr.mxu0 0.0
    %373 = vmatpush2.msra.mxu0 0.0
    %374 = vmatprep.subr.mxu0 0.0
    %375 = vmatpush2.msra.mxu0 0.0
    %376 = vmatprep.subr.mxu0 0.0
    %377 = vmatpush2.msra.mxu0 0.0
    %378 = vmatprep.subr.mxu0 0.0
    %379 = vmatpush2.msra.mxu0 0.0
    %380 = vmatprep.subr.mxu0 0.0
    %381 = vmatpush2.msra.mxu0 0.0
    %382 = vmatprep.subr.mxu0 0.0
    %383 = vmatpush2.msra.mxu0 0.0
    %384 = vmatprep.subr.mxu0 0.0
    %385 = vmatpush2.msra.mxu0 0.0
    %386 = vmatprep.subr.mxu0 0.0
    %387 = vmatpush2.msra.mxu0 0.0
    %388 = vmatprep.subr.mxu0 0.0
    %389 = vmatpush2.msra.mxu0 0.0
    %390 = vmatprep.subr.mxu0 0.0
    %391 = vmatpush2.msra.mxu0 0.0
    %392 = vmatprep.mubr.f32.mxu0 0.0
    %393 = vmatmul.mubr.f32.gmra.mxu0 %v58
    %v394 = vpop.f32.mrf.mxu0
    %v395 = vadd.f32 0.0, %v394
    %v396 = vpop.f32.mrf.mxu0
    %397 = vdwg.mxu0
    %v398 = vsel %vm134, %v395, -inf
    %399 = vmax.xlane.f32.xlu0 %v398
    %v400 = vpop.xlane.xlu0 %399
    %v401 = vsub.f32 %v395, %v400
    %v402 = vmul.f32 %v401, 1.442695
    %v403 = vpow.pop %v402
    %v404 = vsel %vm134, %v403, 0.0
    %405 = vadd.xlane.f32.xlu0 %v404
    %v406 = vpop.xlane.xlu0 %405
    %v407 = vlog2.pop %v406
    %v408 = vmul.f32 %v407, 0.6931472
    %v409 = vsub.f32 %v401, %v408
    %v410 = vmul.f32 %v409, 1.442695
    %v411 = vpow.pop %v410
    %v412 = vmul.f32 %v411, %v409
    %v413 = vsel %vm134, %v412, 0.0
    %414 = vadd.xlane.f32.xlu0 %v413
    %v415 = vpop.xlane.xlu0 %414
    %v416 = vsub.f32 0.0, %v415
    %v417 = vsel %vm134, %v411, 0.0
    %v418 = vrot.slane %v417, 4
    %v419 = vadd.f32 %v417, %v418
    %v420 = vrot.slane %v419, 2
    %v421 = vadd.f32 %v419, %v420
    %v422 = vrot.slane %v421, 1
    %v423 = vadd.f32 %v421, %v422
    %v424 = vmul.f32 %v423, 0.125
    %v425 = vadd.f32 %v424, 1e-12
    %v426 = vlog2.pop %v425
    %v427 = vmul.f32 %v426, 0.6931472
    %v428 = vadd.f32 %v409, %v416
    %v429 = vmul.f32 %v411, %v428
    %v430 = vsub.f32 0.0, %v429
    %v431 = vmul.f32 %v430, 0.125
    %v432 = vmul.f32 %v411, %v427
    %v433 = vsel %vm134, %v432, 0.0
    %434 = vadd.xlane.f32.xlu0 %v433
    %v435 = vpop.xlane.xlu0 %434
    %v436 = vsub.f32 %v427, %v435
    %v437 = vmul.f32 %v411, %v436
    %v438 = vmul.f32 %v437, 0.125
    %v439 = vadd.f32 %v431, %v438
    %440 = vmatprep.subr.mxu0 0.0
    %441 = vmatpush1.msra.mxu0 0.0
    %442 = vmatprep.subr.mxu0 0.0
    %443 = vmatpush1.msra.mxu0 0.0
    %444 = vmatprep.subr.mxu0 0.0
    %445 = vmatpush1.msra.mxu0 0.0
    %446 = vmatprep.subr.mxu0 0.0
    %447 = vmatpush1.msra.mxu0 0.0
    %448 = vmatprep.subr.mxu0 0.0
    %449 = vmatpush1.msra.mxu0 0.0
    %450 = vmatprep.subr.mxu0 0.0
    %451 = vmatpush1.msra.mxu0 0.0
    %452 = vmatprep.subr.mxu0 0.0
    %453 = vmatpush1.msra.mxu0 0.0
    %454 = vmatprep.subr.mxu0 0.0
    %455 = vmatpush1.msra.mxu0 0.0
    %456 = vmatprep.subr.mxu0 0.0
    %457 = vmatpush1.msra.mxu0 0.0
    %458 = vmatprep.subr.mxu0 0.0
    %459 = vmatpush1.msra.mxu0 0.0
    %460 = vmatprep.subr.mxu0 0.0
    %461 = vmatpush1.msra.mxu0 0.0
    %462 = vmatprep.subr.mxu0 0.0
    %463 = vmatpush1.msra.mxu0 0.0
    %464 = vmatprep.subr.mxu0 0.0
    %465 = vmatpush1.msra.mxu0 0.0
    %466 = vmatprep.subr.mxu0 0.0
    %467 = vmatpush1.msra.mxu0 0.0
    %468 = vmatprep.subr.mxu0 0.0
    %469 = vmatpush1.msra.mxu0 0.0
    %470 = vmatprep.subr.mxu0 0.0
    %471 = vmatpush1.msra.mxu0 %v439
    %472 = vmatprep.subr.mxu0 0.0
    %473 = vmatpush2.msra.mxu0 0.0
    %474 = vmatprep.subr.mxu0 0.0
    %475 = vmatpush2.msra.mxu0 0.0
    %476 = vmatprep.subr.mxu0 0.0
    %477 = vmatpush2.msra.mxu0 0.0
    %478 = vmatprep.subr.mxu0 0.0
    %479 = vmatpush2.msra.mxu0 0.0
    %480 = vmatprep.subr.mxu0 0.0
    %481 = vmatpush2.msra.mxu0 0.0
    %482 = vmatprep.subr.mxu0 0.0
    %483 = vmatpush2.msra.mxu0 0.0
    %484 = vmatprep.subr.mxu0 0.0
    %485 = vmatpush2.msra.mxu0 0.0
    %486 = vmatprep.subr.mxu0 0.0
    %487 = vmatpush2.msra.mxu0 0.0
    %488 = vmatprep.subr.mxu0 0.0
    %489 = vmatpush2.msra.mxu0 0.0
    %490 = vmatprep.subr.mxu0 0.0
    %491 = vmatpush2.msra.mxu0 0.0
    %492 = vmatprep.subr.mxu0 0.0
    %493 = vmatpush2.msra.mxu0 0.0
    %494 = vmatprep.subr.mxu0 0.0
    %495 = vmatpush2.msra.mxu0 0.0
    %496 = vmatprep.subr.mxu0 0.0
    %497 = vmatpush2.msra.mxu0 0.0
    %498 = vmatprep.subr.mxu0 0.0
    %499 = vmatpush2.msra.mxu0 0.0
    %500 = vmatprep.subr.mxu0 0.0
    %501 = vmatpush2.msra.mxu0 0.0
    %502 = vmatprep.subr.mxu0 0.0
    %503 = vmatpush2.msra.mxu0 0.0
    %504 = vmatprep.mubr.f32.mxu0 0.0
    %505 = vmatmul.mubr.f32.gmra.mxu0 %v211
    %v506 = vpop.f32.mrf.mxu0
    %v507 = vadd.f32 0.0, %v506
    %v508 = vpop.f32.mrf.mxu0
    %509 = vmatprep.mubr.f32.mxu0 0.0
    %510 = vmatmul.mubr.f32.gmra.mxu0 %v214
    %v511 = vpop.f32.mrf.mxu0
    %v512 = vadd.f32 0.0, %v511
    %v513 = vpop.f32.mrf.mxu0
    %514 = vmatprep.mubr.f32.mxu0 0.0
    %515 = vmatmul.mubr.f32.gmra.mxu0 %v217
    %v516 = vpop.f32.mrf.mxu0
    %v517 = vadd.f32 0.0, %v516
    %v518 = vpop.f32.mrf.mxu0
    %519 = vmatprep.mubr.f32.mxu0 0.0
    %520 = vmatmul.mubr.f32.gmra.mxu0 %v220
    %v521 = vpop.f32.mrf.mxu0
    %v522 = vadd.f32 0.0, %v521
    %v523 = vpop.f32.mrf.mxu0
    %524 = vmatprep.mubr.f32.mxu0 0.0
    %525 = vmatmul.mubr.f32.gmra.mxu0 %v223
    %v526 = vpop.f32.mrf.mxu0
    %v527 = vadd.f32 0.0, %v526
    %v528 = vpop.f32.mrf.mxu0
    %529 = vdwg.mxu0
    %530 = vst.msk [vmem:[#allocation3] sm:$0xff] %vm134, %v395
    %p531 = scmp.gt.s32.totalorder %s33, 0
    %s532 = scalar_select %p531, 1, 0
    %s533 = scvt.s32.f32 %s532
    %v534 = vstv %s533
    %v535 = vmul.f32 %v534, %v30
    %v536 = vmul.f32 %v534, %v31
    %v537 = vmul.f32 %v534, %v32
    %v538 = vmul.f32 %v534, %v28
    %s539 = ssub.f32 1.0, %s533
    %v540 = vstv %s539
    %v541 = vmul.f32 %v540, %v29
    %v542 = vmul.f32 %v540, %v30
    %v543 = vmul.f32 %v540, %v31
    %v544 = vmul.f32 %v540, %v32
    %v545 = vadd.f32 %v535, %v541
    %v546 = vadd.f32 %v536, %v542
    %v547 = vadd.f32 %v537, %v543
    %v548 = vadd.f32 %v538, %v544
    %v549 = vadd.f32 %v536, %v541
    %v550 = vadd.f32 %v537, %v542
    %v551 = vadd.f32 %v538, %v543
    %v552 = vrot.slane %v416, 4
    %v553 = vadd.f32 %v416, %v552
    %v554 = vrot.slane %v553, 2
    %v555 = vadd.f32 %v553, %v554
    %v556 = vrot.slane %v555, 1
    %v557 = vadd.f32 %v555, %v556
    %v558 = vmul.f32 %v557, 0.125
    %v559 = vmul.f32 %v424, %v427
    %v560 = vsel %vm134, %v559, 0.0
    %561 = vadd.xlane.f32.xlu0 %v560
    %v562 = vpop.xlane.xlu0 %561
    %v563 = vadd.f32 %v562, 2.7725887
    %v564 = vsel %vm34, %v545, 0.0
    %v565 = vsel %vm34, %v546, 0.0
    %v566 = vadd.f32 %v564, %v565
    %v567 = vsel %vm34, %v547, 0.0
    %v568 = vadd.f32 %v566, %v567
    %v569 = vsel %vm34, %v548, 0.0
    %v570 = vadd.f32 %v568, %v569
    %v571 = vrot.slane %v570, 4
    %v572 = vadd.f32 %v570, %v571
    %v573 = vrot.slane %v572, 2
    %v574 = vadd.f32 %v572, %v573
    %v575 = vrot.slane %v574, 1
    %v576 = vadd.f32 %v574, %v575
    %v577 = vmul.f32 %v576, 0.03125
    %v578 = vmul.f32 %v577, %v577
    %v579 = vsel %vm34, %v578, 0.0
    %580 = vadd.xlane.f32.xlu0 %v579
    %v581 = vpop.xlane.xlu0 %580
    %v582 = vadd.f32 %v581, 1e-12
    %v583 = vrsqrt.pop %v582
    %v584 = vmul.f32 %v577, %v583
    %v585 = vmul.f32 %v55, %v584
    %v586 = vsel %vm34, %v585, 0.0
    %587 = vadd.xlane.f32.xlu0 %v586
    %v588 = vpop.xlane.xlu0 %587
    %v589 = vsub.f32 1.0, %v588
    %v590 = vadd.f32 %v558, %v563
    %v591 = vadd.f32 %v590, %v589
    %s592 = vtos %v558
    %s593 = scalar_lea.smem [#allocation6], 0
    %594 = sst [smem:[%s593]] %s592
    %s595 = vtos %v563
    %s596 = scalar_lea.smem [#allocation6], 1
    %597 = sst [smem:[%s596]] %s595
    %s598 = vtos %v589
    %s599 = scalar_lea.smem [#allocation6], 2
    %600 = sst [smem:[%s599]] %s598
    %s601 = vtos %v591
    %s602 = scalar_lea.smem [#allocation6], 3
    %603 = sst [smem:[%s602]] %s601
    %v604 = vmul.f32 %v507, 0.001
    %v605 = vmul.f32 %v512, 0.001
    %v606 = vmul.f32 %v517, 0.001
    %v607 = vmul.f32 %v522, 0.001
    %v608 = vmul.f32 %v527, 0.001
    %v609 = vsub.f32 %v320, %v604
    %v610 = vsub.f32 %v321, %v605
    %v611 = vsub.f32 %v322, %v606
    %v612 = vsub.f32 %v323, %v607
    %v613 = vsub.f32 %v324, %v608
    %614 = vst.msk [vmem:[%s7] sm:$0xff] %vm134, %v609
    %615 = vst.msk [vmem:[%s7 + $0x8] sm:$0xff] %vm134, %v610
    %616 = vst.msk [vmem:[%s7 + $0x10] sm:$0xff] %vm134, %v611
    %617 = vst.msk [vmem:[%s7 + $0x18] sm:$0xff] %vm134, %v612
    %vm618 = vcmask 122880
    %619 = vst.msk [vmem:[%s8] sm:$0x1] %vm618, %v613
    %620 = vst.msk [vmem:[%s9] sm:$0xff] %vm34, %v549
    %621 = vst.msk [vmem:[%s9 + $0x8] sm:$0xff] %vm34, %v550
    %622 = vst.msk [vmem:[%s9 + $0x10] sm:$0xff] %vm34, %v551
    %623 = vst.msk [vmem:[%s9 + $0x18] sm:$0xff] %vm34, %v548
    // Predicated region
    $region22: #{tcr_forward.1} parent=1 // pred_check
      _
    $region23: #{tcr_forward.1} parent=1 // pred_check_branch
      %625 = sbr.rel (0) target = $region25
    $region24: #{tcr_forward.1} parent=1 // pred_region
      %s627 = ssub.s32 128, 128
      %628 = vsyncadd [#allocation4], %s627
      %s630 = sshll.u32 [#allocation3], 4
      %s631 = int_to_ptr.vmem [resolvable:$true] %s630
      %633 = dma.vmem_to_hbm [thread:$0]  %s631, 128, %s5, [#allocation4]
    $region25: #{tcr_forward.1} parent=1 // pred_fallthru
      _
    // Predicated region
    $region26: #{tcr_forward.1} parent=1 // pred_check
      _
    $region27: #{tcr_forward.1} parent=1 // pred_check_branch
      %635 = sbr.rel (0) target = $region29
    $region28: #{tcr_forward.1} parent=1 // pred_region
      %s637 = ssub.s32 16, 16
      %638 = vsyncadd [#allocation5], %s637
      %641 = dma.smem_to_hbm [#allocation6], 16, %s6, [#allocation5]
    $region29: #{tcr_forward.1} parent=1 // pred_fallthru
      _
    // Predicated region
    $region30: #{tcr_forward.1} parent=1 // pred_check
      _
    $region31: #{tcr_forward.1} parent=1 // pred_check_branch
      %643 = sbr.rel (0) target = $region33
    $region32: #{tcr_forward.1} parent=1 // pred_region
      _
    $region33: #{tcr_forward.1} parent=1 // pred_fallthru
      _
    // Predicated region
    $region34: #{tcr_forward.1} parent=1 // pred_check
      _
    $region35: #{tcr_forward.1} parent=1 // pred_check_branch
      %645 = sbr.rel (0) target = $region37
    $region36: #{tcr_forward.1} parent=1 // pred_region
      _
    $region37: #{tcr_forward.1} parent=1 // pred_fallthru
      _
    // Predicated region
    $region38: #{tcr_forward.1} parent=1 // pred_check
      _
    $region39: #{tcr_forward.1} parent=1 // pred_check_branch
      %647 = sbr.rel (0) target = $region41
    $region40: #{tcr_forward.1} parent=1 // pred_region
      _
    $region41: #{tcr_forward.1} parent=1 // pred_fallthru
      _
    // Predicated region
    $region42: #{tcr_forward.1} parent=1 // pred_check
      _
    $region43: #{tcr_forward.1} parent=1 // pred_check_branch
      %649 = sbr.rel (0) target = $region45
    $region44: #{tcr_forward.1} parent=1 // pred_region
      %650 = dma.done [#allocation4], 128
    $region45: #{tcr_forward.1} parent=1 // pred_fallthru
      _
    // Predicated region
    $region46: #{tcr_forward.1} parent=1 // pred_check
      _
    $region47: #{tcr_forward.1} parent=1 // pred_check_branch
      %652 = sbr.rel (0) target = $region49
    $region48: #{tcr_forward.1} parent=1 // pred_region
      %653 = dma.done [#allocation5], 16
    $region49: #{tcr_forward.1} parent=1 // pred_fallthru
      _
    // Predicated region
    $region50: #{tcr_forward.1} parent=1 // pred_check
      _
    $region51: #{tcr_forward.1} parent=1 // pred_check_branch
      %655 = sbr.rel (0) target = $region53
    $region52: #{tcr_forward.1} parent=1 // pred_region
      _
    $region53: #{tcr_forward.1} parent=1 // pred_fallthru
      _
    // Predicated region
    $region54: #{tcr_forward.1} parent=1 // pred_check
      _
    $region55: #{tcr_forward.1} parent=1 // pred_check_branch
      %657 = sbr.rel (0) target = $region57
    $region56: #{tcr_forward.1} parent=1 // pred_region
      _
    $region57: #{tcr_forward.1} parent=1 // pred_fallthru
      _
    // Predicated region
    $region58: #{tcr_forward.1} parent=1 // pred_check
      _
    $region59: #{tcr_forward.1} parent=1 // pred_check_branch
      %659 = sbr.rel (0) target = $region61
    $region60: #{tcr_forward.1} parent=1 // pred_region
      _
    $region61: #{tcr_forward.1} parent=1 // pred_fallthru
      _
    %660 = sfence
    %661 = vsyncpa [#allocation4], 1
    %662 = vsyncpa [#allocation5], 1

</llo_original>
